<compile_context>
chip_gen: v7x
topology: tpu7x:2x2x1
jax: 0.10.0
libtpu: 0.0.40
codegen_flags: <defaults>
</compile_context>

<pallas_src>
import functools

import jax
import jax.numpy as jnp
from jax.experimental import pallas as pl
from jax.experimental.pallas import tpu as pltpu


def _round_up(x: int, m: int) -> int:
    return (x + m - 1) // m * m


def _tpu_vmem_capacity_bytes() -> int:
    """Physical VMEM per TensorCore; conservative fallback if query fails."""
    try:
        info = pltpu.get_tpu_info()
        v = int(getattr(info, "vmem_capacity_bytes", 0) or 0)
        if v > 0:
            return v
    except Exception:
        pass
    return 64 << 20  # v7x per-TC VMEM (smallest of the supported chips)


def _rmsnorm_kernel(x_ref, scale_ref, o_ref, *, eps, inv_dim, strip_rows,
                    num_strips):
    scale = scale_ref[...]  # (1, dim) f32, hoisted out of the strip loop

    def strip(r):
        # f32 temporaries are bounded to (strip_rows, dim) regardless of the
        # (much larger) I/O tile, keeping VMEM pressure low.
        x = x_ref[pl.ds(r, strip_rows), :].astype(jnp.float32)
        ms = jnp.sum(x * x, axis=-1, keepdims=True) * inv_dim
        inv = jax.lax.rsqrt(ms + eps)
        o_ref[pl.ds(r, strip_rows), :] = (x * inv * scale).astype(o_ref.dtype)

    if num_strips == 1:
        strip(0)
    else:
        def body(s, carry):
            strip(pl.multiple_of(s * strip_rows, strip_rows))
            return carry
        jax.lax.fori_loop(0, num_strips, body, 0)


def gemma_rms_norm(x, weight, eps: float = 1e-6, *, tile_rows: int | None = None):
    """RMSNorm over the last axis of `x`, Gemma-style (scale = 1 + weight)."""
    orig_shape = x.shape
    dim = orig_shape[-1]
    assert weight.shape == (dim,)

    x2d = x.reshape(-1, dim)
    rows = x2d.shape[0]
    itemsize = jnp.dtype(x.dtype).itemsize
    # Full sublane packing: 8 rows for 32-bit, 16 for 16-bit, 32 for 8-bit.
    row_mult = 8 if itemsize >= 4 else (16 if itemsize == 2 else 32)
    rows_padded = _round_up(rows, row_mult)

    scale = (1.0 + weight.astype(jnp.float32)).reshape(1, dim)

    # --- Per-generation VMEM budget ----------------------------------------
    vmem_cap = _tpu_vmem_capacity_bytes()
    # v7x exposes 64 MiB VMEM per TC and has 2 TCs; v5e/v6e have 128 MiB / 1 TC.
    two_tc = vmem_cap <= (96 << 20)
    # Budget for the double-buffered input + output tiles (4 * tile bytes).
    io_budget = (36 << 20) if two_tc else (80 << 20)

    # --- Strip size: ~512 KiB of f32 work per strip, sublane-aligned --------
    strip_rows = max(row_mult, min(512, (512 << 10) // max(dim * 4, 1)))
    strip_rows = _round_up(strip_rows, row_mult)
    strip_rows = min(strip_rows, rows_padded)

    # --- Row-tile selection (mem-bound: as big as the I/O budget allows) ----
    if tile_rows is None:
        tile_rows = io_budget // (4 * dim * itemsize)
    tile_rows = min(tile_rows, rows_padded)
    tile_rows = max(strip_rows, (tile_rows // strip_rows) * strip_rows)

    # v7x only: keep both TensorCores busy when a single tile would cover all.
    if two_tc and tile_rows >= rows and rows_padded >= 2 * strip_rows:
        tile_rows = max(strip_rows, _round_up(pl.cdiv(rows, 2), strip_rows))

    grid = pl.cdiv(rows, tile_rows)
    # v7x only: prefer an even grid so both TCs get equal step counts.
    if two_tc and grid > 1 and grid % 2 == 1:
        alt = max(strip_rows, _round_up(pl.cdiv(rows, grid + 1), strip_rows))
        if pl.cdiv(rows, alt) % 2 == 0:
            tile_rows = alt
            grid = pl.cdiv(rows, alt)

    num_strips = tile_rows // strip_rows

    # --- Scoped VMEM: 2x(in + out) tiles + strip temps + scale + slack ------
    io_bytes = 4 * tile_rows * dim * itemsize + 2 * dim * 4
    temp_bytes = 4 * strip_rows * dim * 4
    vmem_limit = io_bytes + temp_bytes + (4 << 20)
    vmem_limit = max(16 << 20, min(vmem_limit, (vmem_cap * 3) // 4))

    cost = pl.CostEstimate(
        flops=5 * rows * dim,
        transcendentals=rows,
        bytes_accessed=2 * rows * dim * itemsize + dim * 4,
    )

    out2d = pl.pallas_call(
        functools.partial(_rmsnorm_kernel, eps=eps, inv_dim=1.0 / dim,
                          strip_rows=strip_rows, num_strips=num_strips),
        out_shape=jax.ShapeDtypeStruct((rows, dim), x.dtype),
        grid_spec=pltpu.PrefetchScalarGridSpec(
            num_scalar_prefetch=0,
            grid=(grid,),
            in_specs=[
                pl.BlockSpec((tile_rows, dim), lambda i: (i, 0)),
                pl.BlockSpec((1, dim), lambda i: (0, 0)),
            ],
            out_specs=pl.BlockSpec((tile_rows, dim), lambda i: (i, 0)),
        ),
        compiler_params=pltpu.CompilerParams(
            dimension_semantics=("parallel",),
            vmem_limit_bytes=int(vmem_limit),
        ),
        cost_estimate=cost,
    )(x2d, scale)

    return out2d.reshape(orig_shape)


def gemma_rms_norm_ref(x, weight, eps: float = 1e-6):
    """Pure-JAX reference mirroring the PyTorch module."""
    xf = x.astype(jnp.float32)
    inv = jax.lax.rsqrt(jnp.mean(xf * xf, axis=-1, keepdims=True) + eps)
    out = xf * inv * (1.0 + weight.astype(jnp.float32))
    return out.astype(x.dtype)


if __name__ == "__main__":
    key = jax.random.PRNGKey(0)
    kx, kw = jax.random.split(key)

    # Small shape consistent with the module (non-128 hidden dim exercises the
    # "full-extent last block dim" path with no pad/slice HBM passes).
    batch, seq, hidden = 2, 8, 32
    x = jax.random.normal(kx, (batch, seq, hidden), dtype=jnp.bfloat16)
    # Module init is zeros; use small random values for a stronger check.
    weight = 0.1 * jax.random.normal(kw, (hidden,), dtype=jnp.float32)

    out = gemma_rms_norm(x, weight, eps=1e-6)
    out = jax.block_until_ready(out)

    ref = gemma_rms_norm_ref(x, weight, eps=1e-6)
    assert out.shape == x.shape and out.dtype == x.dtype
    err = jnp.max(jnp.abs(out.astype(jnp.float32) - ref.astype(jnp.float32)))
    assert float(err) < 1e-2, f"max abs err {err}"

    # Second, non-divisible row count + 128-multiple hidden dim (tail block).
    x2 = jax.random.normal(kx, (3, 37, 256), dtype=jnp.float32)
    w2 = 0.05 * jax.random.normal(kw, (256,), dtype=jnp.float32)
    out2 = jax.block_until_ready(gemma_rms_norm(x2, w2))
    ref2 = gemma_rms_norm_ref(x2, w2)
    err2 = jnp.max(jnp.abs(out2 - ref2))
    assert float(err2) < 1e-4, f"max abs err {err2}"

    # Third, larger bf16 shape to exercise the multi-strip / multi-step path.
    x3 = jax.random.normal(kx, (4, 256, 512), dtype=jnp.bfloat16)
    w3 = 0.02 * jax.random.normal(kw, (512,), dtype=jnp.float32)
    out3 = jax.block_until_ready(gemma_rms_norm(x3, w3))
    ref3 = gemma_rms_norm_ref(x3, w3)
    err3 = jnp.max(jnp.abs(out3.astype(jnp.float32) - ref3.astype(jnp.float32)))
    assert float(err3) < 1e-2, f"max abs err {err3}"

    print("KERNEL_OK")
</pallas_src>

<mosaic_0001>
module attributes {stable_mosaic.version = 11 : i64} {
  func.func @_rmsnorm_kernel(%arg0: i32, %arg1: memref<16x32xbf16, #tpu.memory_space<vmem>>, %arg2: memref<1x32xf32, #tpu.memory_space<vmem>>, %arg3: memref<16x32xbf16, #tpu.memory_space<vmem>>) attributes {dimension_semantics = [#tpu.dimension_semantics<parallel>], iteration_bounds = array<i64: 1>, scalar_prefetch = 0 : i64, scratch_operands = 0 : i64, tpu.core_type = #tpu.core_type<tc>, window_params = [{transform_indices = @transform_0, window_bounds = array<i64: 16, 32>}, {pipeline_mode = #tpu.pipeline_mode<synchronous>, transform_indices = @transform_1, window_bounds = array<i64: 1, 32>}, {transform_indices = @transform_2, window_bounds = array<i64: 16, 32>}]} {
    %c0 = arith.constant 0 : index
    %c0_0 = arith.constant 0 : index
    %0 = vector.load %arg2[%c0, %c0_0] : memref<1x32xf32, #tpu.memory_space<vmem>>, vector<1x32xf32>
    %c0_1 = arith.constant 0 : index
    %c0_2 = arith.constant 0 : index
    %1 = vector.load %arg1[%c0_1, %c0_2] : memref<16x32xbf16, #tpu.memory_space<vmem>>, vector<16x32xbf16>
    %2 = arith.extf %1 : vector<16x32xbf16> to vector<16x32xf32>
    %3 = arith.mulf %2, %2 : vector<16x32xf32>
    %cst = arith.constant dense<0.000000e+00> : vector<16xf32>
    %4 = vector.multi_reduction <add>, %3, %cst [1] : vector<16x32xf32> to vector<16xf32>
    %5 = vector.shape_cast %4 : vector<16xf32> to vector<16x1xf32>
    %cst_3 = arith.constant 3.125000e-02 : f32
    %6 = vector.broadcast %cst_3 : f32 to vector<16x1xf32>
    %7 = arith.mulf %5, %6 : vector<16x1xf32>
    %cst_4 = arith.constant 9.99999997E-7 : f32
    %8 = vector.broadcast %cst_4 : f32 to vector<16x1xf32>
    %9 = arith.addf %7, %8 : vector<16x1xf32>
    %10 = math.rsqrt %9 : vector<16x1xf32>
    %11 = vector.broadcast %10 : vector<16x1xf32> to vector<16x32xf32>
    %12 = arith.mulf %2, %11 : vector<16x32xf32>
    %13 = vector.broadcast %0 : vector<1x32xf32> to vector<16x32xf32>
    %14 = arith.mulf %12, %13 : vector<16x32xf32>
    %15 = arith.truncf %14 : vector<16x32xf32> to vector<16x32xbf16>
    %c0_5 = arith.constant 0 : index
    %c0_6 = arith.constant 0 : index
    %16 = vector.load %arg3[%c0_5, %c0_6] : memref<16x32xbf16, #tpu.memory_space<vmem>>, vector<16x32xbf16>
    tpu.vector_store %arg3[%c0_5, %c0_6], %15 {strides = array<i32>} : memref<16x32xbf16, #tpu.memory_space<vmem>>, vector<16x32xbf16>,
    return
  }
  func.func @transform_0(%arg0: i32) -> (i32, i32) {
    %c0_i32 = arith.constant 0 : i32
    %c0_i32_0 = arith.constant 0 : i32
    return %arg0, %c0_i32 : i32, i32
  }
  func.func @transform_1(%arg0: i32) -> (i32, i32) {
    %c0_i32 = arith.constant 0 : i32
    %c0_i32_0 = arith.constant 0 : i32
    %c0_i32_1 = arith.constant 0 : i32
    return %c0_i32, %c0_i32_0 : i32, i32
  }
  func.func @transform_2(%arg0: i32) -> (i32, i32) {
    %c0_i32 = arith.constant 0 : i32
    %c0_i32_0 = arith.constant 0 : i32
    return %arg0, %c0_i32 : i32, i32
  }
}

</mosaic_0001>

<llo_original>
// kernel: tpu_custom_call.1
$region0: #{tpu_custom_call.1}
  #allocation0 [shape = 'u32[]', space=smem, size = 0x4, offset = 0x4, fixed_abs, tag = 'smem constant byte address 0x4 - core index']
  #allocation1 [shape = 'u32[144,128]{1,0:T(1,128)}', space=vmem, size = 0x12000, scoped, tag = 'internal scratch']
  %s0 = inlined_call_operand.hbm [shape: bf16[16,32], index: 0, kind: input, shape index: {}]
  %s1 = inlined_call_operand.vmem [shape: f32[1,32], index: 1, kind: input, shape index: {}]
  %s2 = inlined_call_operand.hbm [shape: bf16[16,32], index: 2, kind: output, shape index: {}]
  %s3 = sld [smem:[#allocation0]]
  $region22: #{tpu_custom_call.1} parent=0
    _
  %s5 = ssub.s32 1, %s3
  %s6 = scalar_select 0, %s5, %s3
  $region1: #{tpu_custom_call.1} parent=0
    #allocation2 [shape = 'u8[4096]{0}', space=vmem, size = 0x1000, scoped, tag = 'input window, operand 0, single buffered']
    #allocation3 [shape = 's32[1]{0}', space=sflag, size = 0x4, scoped, tag = 'scoped memory for tpu_custom_call.1']
    #allocation4 [shape = 's32[1]{0}', space=sflag, size = 0x4, scoped, tag = 'scoped memory for tpu_custom_call.1']
    #allocation5 [shape = 'u8[4096]{0}', space=vmem, size = 0x1000, scoped, tag = 'output window, operand 0, single buffered']
    %7 = vsyncpa [#allocation3], 0
    %8 = vsyncpa [#allocation4], 0
    // Predicated region
    $region2: #{tpu_custom_call.1} parent=1 // pred_check
      _
    $region3: #{tpu_custom_call.1} parent=1 // pred_check_branch
      %10 = sbr.rel (0) target = $region5
    $region4: #{tpu_custom_call.1} parent=1 // pred_region
      %s12 = ssub.s32 128, 128
      %13 = vsyncadd [#allocation3], %s12
      %s14 = sshll.u32 [#allocation2], 4
      %s15 = int_to_ptr.vmem [resolvable:$true] %s14
      %20 = dma.hbm_to_vmem [thread:$0]  %s0, 128, %s15, [#allocation3], 64, 64, 4
    $region5: #{tpu_custom_call.1} parent=1 // pred_fallthru
      _
    // Predicated region
    $region6: #{tpu_custom_call.1} parent=1 // pred_check
      _
    $region7: #{tpu_custom_call.1} parent=1 // pred_check_branch
      %22 = sbr.rel (0) target = $region9
    $region8: #{tpu_custom_call.1} parent=1 // pred_region
      _
    $region9: #{tpu_custom_call.1} parent=1 // pred_fallthru
      _
    // Predicated region
    $region10: #{tpu_custom_call.1} parent=1 // pred_check
      _
    $region11: #{tpu_custom_call.1} parent=1 // pred_check_branch
      %24 = sbr.rel (0) target = $region13
    $region12: #{tpu_custom_call.1} parent=1 // pred_region
      %25 = dma.done [#allocation3], 128
    $region13: #{tpu_custom_call.1} parent=1 // pred_fallthru
      _
    %v26 = vld [vmem:[%s1] sm:$0x1]
    %v27 = vld [vmem:[#allocation2] sm:$0xf]
    %v28 = vld [vmem:[#allocation2 + $0x4] sm:$0xf]
    %v29 = vunpack.c.l.bf16 %v27
    %v30 = vunpack.c.l.bf16 %v28
    %v31 = vmul.f32 %v29, %v29
    %v32 = vmul.f32 %v30, %v30
    %vm33 = vcmask 261120
    %v34 = vsel %vm33, %v31, 0.0
    %35 = vadd.xlane.f32.xlu0 %v34
    %v36 = vpop.xlane.xlu0 %35
    %v37 = vsel %vm33, %v32, 0.0
    %38 = vadd.xlane.f32.xlu0 %v37
    %v39 = vpop.xlane.xlu0 %38
    %v40 = vmul.f32 %v36, 0.03125
    %v41 = vmul.f32 %v39, 0.03125
    %v42 = vadd.f32 %v40, 1e-06
    %v43 = vadd.f32 %v41, 1e-06
    %v44 = vrsqrt.pop %v42
    %v45 = vrsqrt.pop %v43
    %v46 = vmul.f32 %v29, %v44
    %v47 = vmul.f32 %v30, %v45
    %v49 = vlaneseq
    %v50 = vshrl.u32 %v49, 7
    %v51 = vsub.s32 0, %v50
    %v52 = vrot.slane %v26, %v51
    %v54 = vmul.f32 %v46, %v52
    %v55 = vmul.f32 %v47, %v52
    %v56 = vpack.c.bf16 %v55, %v54
    %v58 = vunpack.c.l.b16 %v56
    %v59 = vunpack.c.h.b16 %v56
    %v60 = vpack.c.b16 %v58, %v58
    %v61 = vpack.c.b16 %v59, %v59
    %vm64 = vcmask 257024
    %65 = vst.msk [vmem:[#allocation5] sm:$0xf] %vm64, %v60
    %66 = vst.msk [vmem:[#allocation5 + $0x4] sm:$0xf] %vm64, %v61
    // Predicated region
    $region14: #{tpu_custom_call.1} parent=1 // pred_check
      _
    $region15: #{tpu_custom_call.1} parent=1 // pred_check_branch
      %68 = sbr.rel (0) target = $region17
    $region16: #{tpu_custom_call.1} parent=1 // pred_region
      %s70 = ssub.s32 128, 128
      %71 = vsyncadd [#allocation4], %s70
      %s72 = sshll.u32 [#allocation5], 4
      %s73 = int_to_ptr.vmem [resolvable:$true] %s72
      %78 = dma.vmem_to_hbm [thread:$0]  %s73, 128, %s2, [#allocation4], 64, 64, 4
    $region17: #{tpu_custom_call.1} parent=1 // pred_fallthru
      _
    // Predicated region
    $region18: #{tpu_custom_call.1} parent=1 // pred_check
      _
    $region19: #{tpu_custom_call.1} parent=1 // pred_check_branch
      %80 = sbr.rel (0) target = $region21
    $region20: #{tpu_custom_call.1} parent=1 // pred_region
      %81 = dma.done [#allocation4], 128
    $region21: #{tpu_custom_call.1} parent=1 // pred_fallthru
      _
    %82 = vsyncpa [#allocation3], 1
    %83 = vsyncpa [#allocation4], 1

</llo_original>
